<compile_context>
chip_gen: v5e
topology: v5e:2x2
jax: 0.10.0
libtpu: 0.0.40
codegen_flags: <defaults>
</compile_context>

<pallas_src>
import jax
import jax.numpy as jnp
from jax.experimental import pallas as pl
from jax.experimental.pallas import tpu as pltpu

_LANE = 128       # TPU vreg lane width
_TM_MAX = 2048    # batch-tile width (lanes); >=512 needed to approach HBM roofline


def _linear_kernel(w_ref, xt_ref, yt_ref):
    """One lane-dense batch tile of y.T = W @ x.T.

    w_ref : SMEM (N*K,) f32  -- torch-layout weight (out,in), flattened row-major
    xt_ref: VMEM (K, TM) f32 -- activations, batch on the 128-lane axis
    yt_ref: VMEM (N, TM) f32 -- outputs, batch on the 128-lane axis
    """
    k_dim = xt_ref.shape[0]
    n_dim = yt_ref.shape[0]
    x = xt_ref[...]                               # single (K, TM) load
    for n in range(n_dim):                        # static unroll: N*K = 6 scalar*vector FMAs
        acc = w_ref[n * k_dim] * x[0:1, :]
        for k in range(1, k_dim):
            acc = acc + w_ref[n * k_dim + k] * x[k:k + 1, :]
        yt_ref[n:n + 1, :] = acc                  # full-width, unmasked lane-dense store


def linear_no_bias(x: jax.Array, weight: jax.Array) -> jax.Array:
    """y = x @ weight.T via a lane-dense Pallas TPU kernel (computed as y.T = W @ x.T).

    x:      (B, in_features)                float32
    weight: (out_features, in_features)     float32 (torch nn.Linear layout)
    """
    B, K = x.shape
    N, K2 = weight.shape
    assert K == K2, "in_features mismatch"

    # Batch tile width: round small batches up to one 128-lane tile, cap at _TM_MAX.
    if B >= _TM_MAX:
        tm = _TM_MAX
    else:
        tm = max(_LANE, ((B + _LANE - 1) // _LANE) * _LANE)
    b_pad = ((B + tm - 1) // tm) * tm
    n_tiles = b_pad // tm

    # Wrapper-side layout plumbing only: transpose + zero-pad batch to tile multiple.
    xt = jnp.pad(x.T, ((0, 0), (0, b_pad - B)))       # (K, b_pad)
    w_flat = weight.reshape(-1)                       # (N*K,) row-major scalars

    yt = pl.pallas_call(
        _linear_kernel,
        out_shape=jax.ShapeDtypeStruct((N, b_pad), jnp.float32),
        grid=(n_tiles,),
        in_specs=[
            pl.BlockSpec(memory_space=pltpu.MemorySpace.SMEM),   # 6 weights as SMEM scalars
            pl.BlockSpec((K, tm), lambda i: (0, i)),             # lane-dense activation tile
        ],
        out_specs=pl.BlockSpec((N, tm), lambda i: (0, i)),
        compiler_params=pltpu.CompilerParams(
            dimension_semantics=("parallel",),   # shard batch tiles across TCs on v7x
        ),
        cost_estimate=pl.CostEstimate(
            flops=2 * B * K * N,
            transcendentals=0,
            bytes_accessed=4 * (B * K + K * N + B * N),
        ),
    )(w_flat, xt)

    return yt[:, :B].T                                # (B, N), padded rows dropped


class MyModelPallas:
    """Mirror of the torch MyModel: single Linear(3, 2, bias=False)."""

    def __init__(self, key):
        # torch nn.Linear weight layout is (out_features, in_features) = (2, 3).
        bound = 1.0 / jnp.sqrt(3.0)
        self.fc1_weight = jax.random.uniform(
            key, (2, 3), minval=-bound, maxval=bound, dtype=jnp.float32
        )

    def __call__(self, x):
        return linear_no_bias(x, self.fc1_weight)


if __name__ == "__main__":
    key = jax.random.PRNGKey(0)
    k_w, k_x, k_xb = jax.random.split(key, 3)

    model = MyModelPallas(k_w)

    # Spec-shaped input: torch.randn(1, 3)
    x = jax.random.normal(k_x, (1, 3), dtype=jnp.float32)
    y = jax.block_until_ready(model(x))
    y_ref = x @ model.fc1_weight.T
    assert y.shape == (1, 2)
    assert jnp.allclose(y, y_ref, atol=1e-5, rtol=1e-5)

    # Batched path: exercises a multi-step grid (TM=2048) and the padded tail
    # (2500 = 2048 + 452), verifying no garbage rows are written.
    xb = jax.random.normal(k_xb, (2500, 3), dtype=jnp.float32)
    yb = jax.block_until_ready(model(xb))
    assert yb.shape == (2500, 2)
    assert jnp.allclose(yb, xb @ model.fc1_weight.T, atol=1e-5, rtol=1e-5)

    print("KERNEL_OK")
</pallas_src>

<mosaic_0001>
module attributes {stable_mosaic.version = 11 : i64} {
  func.func @_linear_kernel(%arg0: i32, %arg1: memref<6xf32, #tpu.memory_space<smem>>, %arg2: memref<3x128xf32, #tpu.memory_space<vmem>>, %arg3: memref<2x128xf32, #tpu.memory_space<vmem>>) attributes {dimension_semantics = [#tpu.dimension_semantics<parallel>], iteration_bounds = array<i64: 1>, scalar_prefetch = 0 : i64, scratch_operands = 0 : i64, tpu.core_type = #tpu.core_type<tc>, window_params = [{transform_indices = @transform_0, window_bounds = array<i64: 6>}, {transform_indices = @transform_1, window_bounds = array<i64: 3, 128>}, {transform_indices = @transform_2, window_bounds = array<i64: 2, 128>}]} {
    %c0 = arith.constant 0 : index
    %c0_0 = arith.constant 0 : index
    %0 = vector.load %arg2[%c0, %c0_0] : memref<3x128xf32, #tpu.memory_space<vmem>>, vector<3x128xf32>
    %c0_1 = arith.constant 0 : index
    %1 = memref.load %arg1[%c0_1] : memref<6xf32, #tpu.memory_space<smem>>
    %2 = vector.extract_strided_slice %0 {offsets = [0, 0], sizes = [1, 128], strides = [1, 1]} : vector<3x128xf32> to vector<1x128xf32>
    %3 = vector.broadcast %1 : f32 to vector<1x128xf32>
    %4 = arith.mulf %3, %2 : vector<1x128xf32>
    %c1 = arith.constant 1 : index
    %5 = memref.load %arg1[%c1] : memref<6xf32, #tpu.memory_space<smem>>
    %6 = vector.extract_strided_slice %0 {offsets = [1, 0], sizes = [1, 128], strides = [1, 1]} : vector<3x128xf32> to vector<1x128xf32>
    %7 = vector.broadcast %5 : f32 to vector<1x128xf32>
    %8 = arith.mulf %7, %6 : vector<1x128xf32>
    %9 = arith.addf %4, %8 : vector<1x128xf32>
    %c2 = arith.constant 2 : index
    %10 = memref.load %arg1[%c2] : memref<6xf32, #tpu.memory_space<smem>>
    %11 = vector.extract_strided_slice %0 {offsets = [2, 0], sizes = [1, 128], strides = [1, 1]} : vector<3x128xf32> to vector<1x128xf32>
    %12 = vector.broadcast %10 : f32 to vector<1x128xf32>
    %13 = arith.mulf %12, %11 : vector<1x128xf32>
    %14 = arith.addf %9, %13 : vector<1x128xf32>
    %c0_2 = arith.constant 0 : index
    %c0_3 = arith.constant 0 : index
    %15 = vector.load %arg3[%c0_2, %c0_3] : memref<2x128xf32, #tpu.memory_space<vmem>>, vector<1x128xf32>
    tpu.vector_store %arg3[%c0_2, %c0_3], %14 {strides = array<i32>} : memref<2x128xf32, #tpu.memory_space<vmem>>, vector<1x128xf32>,
    %c3 = arith.constant 3 : index
    %16 = memref.load %arg1[%c3] : memref<6xf32, #tpu.memory_space<smem>>
    %17 = vector.extract_strided_slice %0 {offsets = [0, 0], sizes = [1, 128], strides = [1, 1]} : vector<3x128xf32> to vector<1x128xf32>
    %18 = vector.broadcast %16 : f32 to vector<1x128xf32>
    %19 = arith.mulf %18, %17 : vector<1x128xf32>
    %c4 = arith.constant 4 : index
    %20 = memref.load %arg1[%c4] : memref<6xf32, #tpu.memory_space<smem>>
    %21 = vector.extract_strided_slice %0 {offsets = [1, 0], sizes = [1, 128], strides = [1, 1]} : vector<3x128xf32> to vector<1x128xf32>
    %22 = vector.broadcast %20 : f32 to vector<1x128xf32>
    %23 = arith.mulf %22, %21 : vector<1x128xf32>
    %24 = arith.addf %19, %23 : vector<1x128xf32>
    %c5 = arith.constant 5 : index
    %25 = memref.load %arg1[%c5] : memref<6xf32, #tpu.memory_space<smem>>
    %26 = vector.extract_strided_slice %0 {offsets = [2, 0], sizes = [1, 128], strides = [1, 1]} : vector<3x128xf32> to vector<1x128xf32>
    %27 = vector.broadcast %25 : f32 to vector<1x128xf32>
    %28 = arith.mulf %27, %26 : vector<1x128xf32>
    %29 = arith.addf %24, %28 : vector<1x128xf32>
    %c1_4 = arith.constant 1 : index
    %c0_5 = arith.constant 0 : index
    %30 = vector.load %arg3[%c1_4, %c0_5] : memref<2x128xf32, #tpu.memory_space<vmem>>, vector<1x128xf32>
    tpu.vector_store %arg3[%c1_4, %c0_5], %29 {strides = array<i32>} : memref<2x128xf32, #tpu.memory_space<vmem>>, vector<1x128xf32>,
    return
  }
  func.func @transform_0(%arg0: i32) -> i32 {
    %c0_i32 = arith.constant 0 : i32
    %c0_i32_0 = arith.constant 0 : i32
    return %c0_i32 : i32
  }
  func.func @transform_1(%arg0: i32) -> (i32, i32) {
    %c0_i32 = arith.constant 0 : i32
    %c0_i32_0 = arith.constant 0 : i32
    return %c0_i32, %arg0 : i32, i32
  }
  func.func @transform_2(%arg0: i32) -> (i32, i32) {
    %c0_i32 = arith.constant 0 : i32
    %c0_i32_0 = arith.constant 0 : i32
    return %c0_i32, %arg0 : i32, i32
  }
}

</mosaic_0001>

<llo_original>
// kernel: tpu_custom_call.1
$region0: #{tpu_custom_call.1}
  #allocation0 [shape = 'u32[]', space=smem, size = 0x4, offset = 0x4, fixed_abs, tag = 'smem constant byte address 0x4 - core index']
  #allocation1 [shape = 'u32[72,128]{1,0:T(1,128)}', space=vmem, size = 0x9000, scoped, tag = 'internal scratch']
  %s0 = inlined_call_operand.hbm [shape: f32[6], index: 0, kind: input, shape index: {}]
  %s1 = inlined_call_operand.hbm [shape: f32[3,128], index: 1, kind: input, shape index: {}]
  %s2 = inlined_call_operand.hbm [shape: f32[2,128], index: 2, kind: output, shape index: {}]
  %s3 = sld [smem:[#allocation0]]
  $region26: #{tpu_custom_call.1} parent=0
    _
  %s5 = ssub.s32 1, %s3
  %s6 = scalar_select 0, %s5, %s3
  $region1: #{tpu_custom_call.1} parent=0
    #allocation2 [shape = 'u8[512]{0}', space=smem, size = 0x200, scoped, tag = 'input window, operand 0, single buffered']
    #allocation3 [shape = 's32[1]{0}', space=sflag, size = 0x4, scoped, tag = 'scoped memory for tpu_custom_call.1']
    #allocation4 [shape = 's32[1]{0}', space=sflag, size = 0x4, scoped, tag = 'scoped memory for tpu_custom_call.1']
    #allocation5 [shape = 's32[1]{0}', space=sflag, size = 0x4, scoped, tag = 'scoped memory for tpu_custom_call.1']
    #allocation6 [shape = 'u8[2048]{0}', space=vmem, size = 0x800, scoped, tag = 'input window, operand 1, single buffered']
    #allocation7 [shape = 'u8[1024]{0}', space=vmem, size = 0x400, scoped, tag = 'output window, operand 0, single buffered']
    %7 = vsyncpa [#allocation5], 0
    %8 = vsyncpa [#allocation3], 0
    %9 = vsyncpa [#allocation4], 0
    // Predicated region
    $region2: #{tpu_custom_call.1} parent=1 // pred_check
      _
    $region3: #{tpu_custom_call.1} parent=1 // pred_check_branch
      %11 = sbr.rel (0) target = $region5
    $region4: #{tpu_custom_call.1} parent=1 // pred_region
      %13 = vsyncadd [#allocation5], 0
      %s15 = sshll.u32 %s0, 4
      %s16 = int_to_ptr.hbm [resolvable:$true] %s15
      %18 = dma.hbm_to_smem %s16, 16, [#allocation2], [#allocation5]
    $region5: #{tpu_custom_call.1} parent=1 // pred_fallthru
      _
    // Predicated region
    $region6: #{tpu_custom_call.1} parent=1 // pred_check
      _
    $region7: #{tpu_custom_call.1} parent=1 // pred_check_branch
      %20 = sbr.rel (0) target = $region9
    $region8: #{tpu_custom_call.1} parent=1 // pred_region
      %22 = vsyncadd [#allocation3], 0
      %s24 = sshll.u32 %s1, 4
      %s25 = int_to_ptr.hbm [resolvable:$true] %s24
      %s26 = sshll.u32 [#allocation6], 4
      %s27 = int_to_ptr.vmem [resolvable:$true] %s26
      %29 = dma.hbm_to_vmem [thread:$0]  %s25, 64, %s27, [#allocation3]
    $region9: #{tpu_custom_call.1} parent=1 // pred_fallthru
      _
    // Predicated region
    $region10: #{tpu_custom_call.1} parent=1 // pred_check
      _
    $region11: #{tpu_custom_call.1} parent=1 // pred_check_branch
      %31 = sbr.rel (0) target = $region13
    $region12: #{tpu_custom_call.1} parent=1 // pred_region
      %33 = dma.done [#allocation5], 16
    $region13: #{tpu_custom_call.1} parent=1 // pred_fallthru
      _
    // Predicated region
    $region14: #{tpu_custom_call.1} parent=1 // pred_check
      _
    $region15: #{tpu_custom_call.1} parent=1 // pred_check_branch
      %35 = sbr.rel (0) target = $region17
    $region16: #{tpu_custom_call.1} parent=1 // pred_region
      %37 = dma.done [#allocation3], 64
    $region17: #{tpu_custom_call.1} parent=1 // pred_fallthru
      _
    %38 = sfence
    %v39 = vld [vmem:[#allocation6] sm:$0x7]
    %s40 = sld [smem:[#allocation2]]
    %v41 = vstv %s40
    %v42 = vmul.f32 %v41, %v39
    %s43 = sld [smem:[#allocation2 + $0x1]]
    %v44 = vstv %s43
    %v45 = vmul.f32 %v44, %v39
    %v47 = vrot.slane %v45, 1
    %v49 = vadd.f32 %v42, %v47
    %s50 = sld [smem:[#allocation2 + $0x2]]
    %v51 = vstv %s50
    %v52 = vmul.f32 %v51, %v39
    %v54 = vrot.slane %v52, 2
    %v56 = vadd.f32 %v49, %v54
    %57 = vst [vmem:[#allocation7] sm:$0x1] %v56
    %s58 = sld [smem:[#allocation2 + $0x3]]
    %v59 = vstv %s58
    %v60 = vmul.f32 %v59, %v39
    %s61 = sld [smem:[#allocation2 + $0x4]]
    %v62 = vstv %s61
    %v63 = vmul.f32 %v62, %v39
    %v65 = vrot.slane %v63, 1
    %v67 = vadd.f32 %v60, %v65
    %s68 = sld [smem:[#allocation2 + $0x5]]
    %v69 = vstv %s68
    %v70 = vmul.f32 %v69, %v39
    %v72 = vrot.slane %v70, 2
    %v74 = vadd.f32 %v67, %v72
    %75 = vst [vmem:[#allocation7 + $0x1] sm:$0x1] %v74
    // Predicated region
    $region18: #{tpu_custom_call.1} parent=1 // pred_check
      _
    $region19: #{tpu_custom_call.1} parent=1 // pred_check_branch
      %77 = sbr.rel (0) target = $region21
    $region20: #{tpu_custom_call.1} parent=1 // pred_region
      %79 = vsyncadd [#allocation4], 0
      %s81 = sshll.u32 [#allocation7], 4
      %s82 = int_to_ptr.vmem [resolvable:$true] %s81
      %s83 = sshll.u32 %s2, 4
      %s84 = int_to_ptr.hbm [resolvable:$true] %s83
      %86 = dma.vmem_to_hbm [thread:$0]  %s82, 32, %s84, [#allocation4]
    $region21: #{tpu_custom_call.1} parent=1 // pred_fallthru
      _
    // Predicated region
    $region22: #{tpu_custom_call.1} parent=1 // pred_check
      _
    $region23: #{tpu_custom_call.1} parent=1 // pred_check_branch
      %88 = sbr.rel (0) target = $region25
    $region24: #{tpu_custom_call.1} parent=1 // pred_region
      %90 = dma.done [#allocation4], 32
    $region25: #{tpu_custom_call.1} parent=1 // pred_fallthru
      _
    %91 = vsyncpa [#allocation3], 1
    %92 = vsyncpa [#allocation4], 1
    %93 = vsyncpa [#allocation5], 1

</llo_original>
